<compile_context>
chip_gen: v6e
topology: v6e:2x2x1
jax: 0.10.0
libtpu: 0.0.40
codegen_flags: <defaults>
</compile_context>

<pallas_src>
import jax
import jax.numpy as jnp
from jax.experimental import pallas as pl
from jax.experimental.pallas import tpu as pltpu


def _round_up(x, m):
    return ((x + m - 1) // m) * m


def _softmax_ce_kernel(logits_ref, labels_ref, weight_ref, loss_ref):
    """Per-tile weighted softmax cross entropy.

    logits_ref : (TN, C)  logits tile, full class dim (native dtype; f32 math)
    labels_ref : (TN, 1)  i32 integer class labels (already clipped/safe)
    weight_ref : (TN, 1)  f32 combined weight = class_weight[label]*sample_w
                          (0 for invalid labels)
    loss_ref   : (TN, 1)  f32 per-sample weighted loss
    """
    x = logits_ref[...].astype(jnp.float32)          # (TN, C)
    y = labels_ref[...]                              # (TN, 1) int32
    _, c = x.shape

    # (1, C) iota broadcast against (TN, 1) labels -> one-hot mask.
    classes = jax.lax.broadcasted_iota(jnp.int32, (1, c), 1)
    onehot = classes == y                            # (TN, C) bool

    # Numerically stable log-sum-exp along the class (lane) axis.  The block's
    # last dim is the full logical C, so lane reductions only cover real data.
    m = jnp.max(x, axis=-1, keepdims=True)
    lse = m + jnp.log(jnp.sum(jnp.exp(x - m), axis=-1, keepdims=True))
    picked = jnp.sum(jnp.where(onehot, x, 0.0), axis=-1, keepdims=True)

    loss_ref[...] = (lse - picked) * weight_ref[...]


def _vmem_capacity_bytes():
    try:
        return int(pltpu.get_tpu_info().vmem_capacity_bytes)
    except Exception:
        return 128 * 1024 * 1024   # v5e / v6e default


def _ce_pallas(logits, labels, comb_weight):
    """Returns per-sample weighted CE loss, shape (N,), f32.

    logits      : (N, C)  float (native dtype is streamed; compute is f32)
    labels      : (N,)    int32, already clipped into [0, C)
    comb_weight : (N,)    f32 combined class/sample weight (0 = ignore row)
    """
    n, c = logits.shape
    itemsize = jnp.dtype(logits.dtype).itemsize

    # Per-generation sizing: v5e/v6e have 128 MiB VMEM per TC, v7x only 64 MiB.
    vmem_cap = _vmem_capacity_bytes()
    if vmem_cap >= 128 * 1024 * 1024:            # v5e / v6e
        per_buf_budget = 8 * 1024 * 1024
        vmem_limit = 48 * 1024 * 1024
    else:                                        # v7x (64 MiB per TC)
        per_buf_budget = 4 * 1024 * 1024
        vmem_limit = 28 * 1024 * 1024

    # Row tile: largest that fits the per-buffer budget (Pallas double-buffers
    # it), capped at 8192 rows and at the problem size, and kept to >= ~4 grid
    # steps so both v7x TensorCores get work under ("parallel",).
    tile_n = per_buf_budget // max(1, c * itemsize)
    tile_n = min(tile_n, 8192, _round_up(n, 8),
                 max(8, _round_up(-(-n // 4), 8)))
    tile_n = max(8, (tile_n // 8) * 8)

    labels2d = labels.reshape(n, 1).astype(jnp.int32)
    w2d = comb_weight.reshape(n, 1).astype(jnp.float32)

    grid = (pl.cdiv(n, tile_n),)                 # trailing block may be partial
    out = pl.pallas_call(
        _softmax_ce_kernel,
        out_shape=jax.ShapeDtypeStruct((n, 1), jnp.float32),
        grid_spec=pltpu.PrefetchScalarGridSpec(
            num_scalar_prefetch=0,
            grid=grid,
            in_specs=[
                # last dim == full array dim C -> no class-dim padding needed
                pl.BlockSpec((tile_n, c), lambda i: (i, 0)),   # logits
                pl.BlockSpec((tile_n, 1), lambda i: (i, 0)),   # labels
                pl.BlockSpec((tile_n, 1), lambda i: (i, 0)),   # combined w
            ],
            out_specs=pl.BlockSpec((tile_n, 1), lambda i: (i, 0)),
        ),
        compiler_params=pltpu.CompilerParams(
            # no carried accumulator -> fully parallel grid (megacore on v7x)
            dimension_semantics=("parallel",),
            vmem_limit_bytes=vmem_limit,
        ),
    )(logits, labels2d, w2d)

    return out[:, 0]


class CrossEntropyLoss:
    """JAX/Pallas port of mmdet CrossEntropyLoss (default softmax-CE branch)."""

    def __init__(self, use_sigmoid=False, use_mask=False, use_focal_loss=False,
                 reduction='mean', class_weight=None, loss_weight=1.0):
        assert use_sigmoid is False or use_mask is False
        # TODO(synk): use_sigmoid / use_mask / focal_loss branches (the focal
        # branch contains data-dependent Python loops) are not implemented;
        # only the default softmax cross-entropy branch is ported.
        assert not (use_sigmoid or use_mask or use_focal_loss), \
            "only the default softmax cross-entropy branch is implemented"
        self.use_sigmoid = use_sigmoid
        self.use_mask = use_mask
        self.use_focal_loss = use_focal_loss
        self.reduction = reduction
        self.loss_weight = loss_weight
        self.class_weight = class_weight

    def forward(self, cls_score, label, weight=None, avg_factor=None,
                reduction_override=None):
        assert reduction_override in (None, 'none', 'mean', 'sum')
        reduction = reduction_override if reduction_override else self.reduction

        cls_score = jnp.asarray(cls_score)
        n, c = cls_score.shape

        label = jnp.asarray(label, jnp.int32).reshape(n)
        valid = (label >= 0) & (label < c)
        safe_label = jnp.clip(label, 0, c - 1)

        # Combined per-sample weight = class_weight[label] * sample_weight,
        # gathered once in plain JAX (O(N), removes per-tile VPU/XLU work and
        # the class-weight DMA stream from the kernel).
        if self.class_weight is not None:
            cw_vec = jnp.asarray(self.class_weight, jnp.float32)
            cw = cw_vec[safe_label]
        else:
            cw = jnp.ones((n,), jnp.float32)
        if weight is not None:
            sw = jnp.asarray(weight, jnp.float32).reshape(n)
        else:
            sw = jnp.ones((n,), jnp.float32)
        comb_w = jnp.where(valid, cw * sw, 0.0)

        # Logits are streamed in their native dtype (pass bf16 from the
        # producer to halve the dominant HBM stream); compute is f32 in-kernel.
        per_loss = _ce_pallas(cls_score, safe_label, comb_w)   # (N,) f32

        if reduction == 'none':
            loss = per_loss
        elif reduction == 'sum':
            loss = jnp.sum(per_loss)
        else:  # 'mean' — matches mmdet weight_reduce_loss semantics
            denom = jnp.float32(n) if avg_factor is None else jnp.float32(avg_factor)
            loss = jnp.sum(per_loss) / denom
        return self.loss_weight * loss

    __call__ = forward


if __name__ == "__main__":
    key = jax.random.PRNGKey(0)
    k1, k2, k3 = jax.random.split(key, 3)

    N, C = 64, 16
    cls_score = jax.random.normal(k1, (N, C), dtype=jnp.float32)
    label = jax.random.randint(k2, (N,), 0, C, dtype=jnp.int32)
    sample_weight = jax.random.uniform(k3, (N,), dtype=jnp.float32) + 0.5

    # deterministic "class_weight" parameter from the module config
    class_weight = [1.0 + 0.05 * i for i in range(C)]

    loss_mod = CrossEntropyLoss(reduction='mean',
                                class_weight=class_weight,
                                loss_weight=1.0)
    loss = loss_mod(cls_score, label, weight=sample_weight)
    loss = jax.block_until_ready(loss)

    # pure-JAX reference (same semantics as F.cross_entropy(..., reduction='none')
    # with class weights, then weight_reduce_loss mean)
    logp = jax.nn.log_softmax(cls_score, axis=-1)
    cw = jnp.asarray(class_weight, jnp.float32)
    per_ref = -logp[jnp.arange(N), label] * cw[label] * sample_weight
    ref = per_ref.mean()
    assert abs(float(loss) - float(ref)) < 1e-4, (float(loss), float(ref))

    # also exercise 'none' and 'sum' reductions
    loss_none = jax.block_until_ready(
        loss_mod(cls_score, label, weight=sample_weight,
                 reduction_override='none'))
    assert jnp.allclose(loss_none, per_ref, atol=1e-4)

    loss_sum = jax.block_until_ready(
        loss_mod(cls_score, label, weight=sample_weight,
                 reduction_override='sum'))
    assert abs(float(loss_sum) - float(per_ref.sum())) < 1e-3

    # exercise the cdiv grid / partial trailing block path (N not a multiple
    # of the row tile or of 8), no class_weight / sample weight.
    N2 = 50
    cls2 = jax.random.normal(jax.random.PRNGKey(1), (N2, C), dtype=jnp.float32)
    lab2 = jax.random.randint(jax.random.PRNGKey(2), (N2,), 0, C, dtype=jnp.int32)
    loss_mod2 = CrossEntropyLoss(reduction='mean')
    loss2 = jax.block_until_ready(loss_mod2(cls2, lab2))
    logp2 = jax.nn.log_softmax(cls2, axis=-1)
    ref2 = (-logp2[jnp.arange(N2), lab2]).mean()
    assert abs(float(loss2) - float(ref2)) < 1e-4, (float(loss2), float(ref2))

    print("KERNEL_OK")
</pallas_src>

<mosaic_0001>
module attributes {stable_mosaic.version = 11 : i64} {
  func.func @_softmax_ce_kernel(%arg0: i32, %arg1: memref<16x16xf32, #tpu.memory_space<vmem>>, %arg2: memref<16x1xi32, #tpu.memory_space<vmem>>, %arg3: memref<16x1xf32, #tpu.memory_space<vmem>>, %arg4: memref<16x1xf32, #tpu.memory_space<vmem>>) attributes {dimension_semantics = [#tpu.dimension_semantics<parallel>], iteration_bounds = array<i64: 4>, scalar_prefetch = 0 : i64, scratch_operands = 0 : i64, tpu.core_type = #tpu.core_type<tc>, window_params = [{transform_indices = @transform_0, window_bounds = array<i64: 16, 16>}, {transform_indices = @transform_1, window_bounds = array<i64: 16, 1>}, {transform_indices = @transform_2, window_bounds = array<i64: 16, 1>}, {transform_indices = @transform_3, window_bounds = array<i64: 16, 1>}]} {
    %c0 = arith.constant 0 : index
    %c0_0 = arith.constant 0 : index
    %0 = vector.load %arg1[%c0, %c0_0] : memref<16x16xf32, #tpu.memory_space<vmem>>, vector<16x16xf32>
    %c0_1 = arith.constant 0 : index
    %c0_2 = arith.constant 0 : index
    %1 = vector.load %arg2[%c0_1, %c0_2] : memref<16x1xi32, #tpu.memory_space<vmem>>, vector<16x1xi32>
    %2 = tpu.iota {dimensions = array<i32: 1>} : vector<1x16xi32>
    %3 = vector.broadcast %2 : vector<1x16xi32> to vector<16x16xi32>
    %4 = vector.broadcast %1 : vector<16x1xi32> to vector<16x16xi32>
    %5 = arith.cmpi eq, %3, %4 : vector<16x16xi32>
    %cst = arith.constant dense<0xFF800000> : vector<16xf32>
    %6 = vector.multi_reduction <maximumf>, %0, %cst [1] : vector<16x16xf32> to vector<16xf32>
    %7 = vector.shape_cast %6 : vector<16xf32> to vector<16x1xf32>
    %8 = vector.broadcast %7 : vector<16x1xf32> to vector<16x16xf32>
    %9 = arith.subf %0, %8 : vector<16x16xf32>
    %10 = math.exp %9 : vector<16x16xf32>
    %cst_3 = arith.constant dense<0.000000e+00> : vector<16xf32>
    %11 = vector.multi_reduction <add>, %10, %cst_3 [1] : vector<16x16xf32> to vector<16xf32>
    %12 = vector.shape_cast %11 : vector<16xf32> to vector<16x1xf32>
    %13 = math.log %12 : vector<16x1xf32>
    %14 = arith.addf %7, %13 : vector<16x1xf32>
    %cst_4 = arith.constant 0.000000e+00 : f32
    %15 = vector.broadcast %cst_4 : f32 to vector<16x16xf32>
    %16 = arith.select %5, %0, %15 : vector<16x16xi1>, vector<16x16xf32>
    %cst_5 = arith.constant dense<0.000000e+00> : vector<16xf32>
    %17 = vector.multi_reduction <add>, %16, %cst_5 [1] : vector<16x16xf32> to vector<16xf32>
    %18 = vector.shape_cast %17 : vector<16xf32> to vector<16x1xf32>
    %19 = arith.subf %14, %18 : vector<16x1xf32>
    %c0_6 = arith.constant 0 : index
    %c0_7 = arith.constant 0 : index
    %20 = vector.load %arg3[%c0_6, %c0_7] : memref<16x1xf32, #tpu.memory_space<vmem>>, vector<16x1xf32>
    %21 = arith.mulf %19, %20 : vector<16x1xf32>
    %c0_8 = arith.constant 0 : index
    %c0_9 = arith.constant 0 : index
    %22 = vector.load %arg4[%c0_8, %c0_9] : memref<16x1xf32, #tpu.memory_space<vmem>>, vector<16x1xf32>
    tpu.vector_store %arg4[%c0_8, %c0_9], %21 {strides = array<i32>} : memref<16x1xf32, #tpu.memory_space<vmem>>, vector<16x1xf32>,
    return
  }
  func.func @transform_0(%arg0: i32) -> (i32, i32) {
    %c0_i32 = arith.constant 0 : i32
    %c0_i32_0 = arith.constant 0 : i32
    return %arg0, %c0_i32 : i32, i32
  }
  func.func @transform_1(%arg0: i32) -> (i32, i32) {
    %c0_i32 = arith.constant 0 : i32
    %c0_i32_0 = arith.constant 0 : i32
    return %arg0, %c0_i32 : i32, i32
  }
  func.func @transform_2(%arg0: i32) -> (i32, i32) {
    %c0_i32 = arith.constant 0 : i32
    %c0_i32_0 = arith.constant 0 : i32
    return %arg0, %c0_i32 : i32, i32
  }
  func.func @transform_3(%arg0: i32) -> (i32, i32) {
    %c0_i32 = arith.constant 0 : i32
    %c0_i32_0 = arith.constant 0 : i32
    return %arg0, %c0_i32 : i32, i32
  }
}

</mosaic_0001>

<llo_original>
// kernel: tpu_custom_call.1
$region0: #{tpu_custom_call.1}
  #allocation0 [shape = 'u32[]', space=smem, size = 0x4, offset = 0x4, fixed_abs, tag = 'smem constant byte address 0x4 - core index']
  #allocation1 [shape = 'u32[144,128]{1,0:T(1,128)}', space=vmem, size = 0x12000, scoped, tag = 'internal scratch']
  %s0 = inlined_call_operand.vmem [shape: f32[64,16], index: 0, kind: input, shape index: {}]
  %s1 = inlined_call_operand.vmem [shape: s32[64,1], index: 1, kind: input, shape index: {}]
  %s2 = inlined_call_operand.vmem [shape: f32[64,1], index: 2, kind: input, shape index: {}]
  %s3 = inlined_call_operand.vmem [shape: f32[64,1], index: 3, kind: output, shape index: {}]
  %s4 = sld [smem:[#allocation0]]
  $region45: #{tpu_custom_call.1} parent=0
    _
  %s6 = ssub.s32 1, %s4
  %s7 = scalar_select 0, %s6, %s4
  loop: start=0, step=1, limit=6
  $region2: #{tpu_custom_call.1} parent=0 // loop_pre_header
    _
  $region3: #{tpu_custom_call.1} parent=0 // loop_header
    %s9 = sphi 0, %s13
    %p10 = scmp.ge.s32.totalorder %s9, 6
    %s19 = sphi 0, %s21
    %s22 = sphi 0, %s19
    %s23 = sphi 0, %s22
    %s39 = sphi 0, %s23
    %s45 = sphi 0, %s47
    %s48 = sphi 0, %s45
    %s49 = sphi 0, %s48
    %s65 = sphi 0, %s49
    %s71 = sphi 0, %s73
    %s74 = sphi 0, %s71
    %s75 = sphi 0, %s74
    %s91 = sphi 0, %s75
    %s97 = sphi 0, %s99
    %s100 = sphi 0, %s97
    %s101 = sphi 0, %s100
    %s117 = sphi 0, %s101
  $region4: #{tpu_custom_call.1} parent=0 // loop_header_branch
    %12 = sbr.rel (%p10) target = $region8
  $region5: #{tpu_custom_call.1} parent=0 // loop_body
    %s14 = ssub.s32 %s9, 1
    %s15 = ssub.s32 %s9, 2
    %s16 = sadd.s32 %s9, 1
    %s17 = ssub.s32 %s9, %s16
    %p18 = scmp.eq.s32.totalorder %s17, 0
    %s20 = sadd.s32 %s19, 1
    %s21 = scalar_select %p18, %s19, %s20
    %p24 = pneg %p18
    %p25 = scmp.eq.s32.totalorder %s9, 3
    %p26 = por %p24, %p25
    %p27 = scmp.ne.s32.totalorder %s19, %s22
    %p28 = scmp.eq.s32.totalorder %s9, 0
    %p29 = por %p27, %p28
    %p30 = scmp.ne.s32.totalorder %s19, %s22
    %p31 = scmp.eq.s32.totalorder %s14, 3
    %p32 = por %p30, %p31
    %p33 = scmp.ne.s32.totalorder %s22, %s23
    %p34 = scmp.eq.s32.totalorder %s14, 0
    %p35 = por %p33, %p34
    %p36 = scmp.ne.s32.totalorder %s22, %s23
    %p37 = scmp.eq.s32.totalorder %s15, 3
    %p38 = por %p36, %p37
    %p40 = scmp.ne.s32.totalorder %s23, %s39
    %p41 = scmp.eq.s32.totalorder %s15, 0
    %p42 = por %p40, %p41
    %s43 = ssub.s32 %s9, %s16
    %p44 = scmp.eq.s32.totalorder %s43, 0
    %s46 = sadd.s32 %s45, 1
    %s47 = scalar_select %p44, %s45, %s46
    %p50 = pneg %p44
    %p51 = scmp.eq.s32.totalorder %s9, 3
    %p52 = por %p50, %p51
    %p53 = scmp.ne.s32.totalorder %s45, %s48
    %p54 = scmp.eq.s32.totalorder %s9, 0
    %p55 = por %p53, %p54
    %p56 = scmp.ne.s32.totalorder %s45, %s48
    %p57 = scmp.eq.s32.totalorder %s14, 3
    %p58 = por %p56, %p57
    %p59 = scmp.ne.s32.totalorder %s48, %s49
    %p60 = scmp.eq.s32.totalorder %s14, 0
    %p61 = por %p59, %p60
    %p62 = scmp.ne.s32.totalorder %s48, %s49
    %p63 = scmp.eq.s32.totalorder %s15, 3
    %p64 = por %p62, %p63
    %p66 = scmp.ne.s32.totalorder %s49, %s65
    %p67 = scmp.eq.s32.totalorder %s15, 0
    %p68 = por %p66, %p67
    %s69 = ssub.s32 %s9, %s16
    %p70 = scmp.eq.s32.totalorder %s69, 0
    %s72 = sadd.s32 %s71, 1
    %s73 = scalar_select %p70, %s71, %s72
    %p76 = pneg %p70
    %p77 = scmp.eq.s32.totalorder %s9, 3
    %p78 = por %p76, %p77
    %p79 = scmp.ne.s32.totalorder %s71, %s74
    %p80 = scmp.eq.s32.totalorder %s9, 0
    %p81 = por %p79, %p80
    %p82 = scmp.ne.s32.totalorder %s71, %s74
    %p83 = scmp.eq.s32.totalorder %s14, 3
    %p84 = por %p82, %p83
    %p85 = scmp.ne.s32.totalorder %s74, %s75
    %p86 = scmp.eq.s32.totalorder %s14, 0
    %p87 = por %p85, %p86
    %p88 = scmp.ne.s32.totalorder %s74, %s75
    %p89 = scmp.eq.s32.totalorder %s15, 3
    %p90 = por %p88, %p89
    %p92 = scmp.ne.s32.totalorder %s75, %s91
    %p93 = scmp.eq.s32.totalorder %s15, 0
    %p94 = por %p92, %p93
    %s95 = ssub.s32 %s9, %s16
    %p96 = scmp.eq.s32.totalorder %s95, 0
    %s98 = sadd.s32 %s97, 1
    %s99 = scalar_select %p96, %s97, %s98
    %p102 = pneg %p96
    %p103 = scmp.eq.s32.totalorder %s9, 3
    %p104 = por %p102, %p103
    %p105 = scmp.ne.s32.totalorder %s97, %s100
    %p106 = scmp.eq.s32.totalorder %s9, 0
    %p107 = por %p105, %p106
    %p108 = scmp.ne.s32.totalorder %s97, %s100
    %p109 = scmp.eq.s32.totalorder %s14, 3
    %p110 = por %p108, %p109
    %p111 = scmp.ne.s32.totalorder %s100, %s101
    %p112 = scmp.eq.s32.totalorder %s14, 0
    %p113 = por %p111, %p112
    %p114 = scmp.ne.s32.totalorder %s100, %s101
    %p115 = scmp.eq.s32.totalorder %s15, 3
    %p116 = por %p114, %p115
    %p118 = scmp.ne.s32.totalorder %s101, %s117
    %p119 = scmp.eq.s32.totalorder %s15, 0
    %p120 = por %p118, %p119
    %p121 = scmp.le.s32.totalorder 1, %s9
    %p122 = scmp.lt.s32.totalorder %s9, 5
    %p123 = pnand %p121, %p122
    %p124 = pneg %p123
    // Predicated region
    $region9: #{tpu_custom_call.1} parent=5 // pred_check
      _
    $region10: #{tpu_custom_call.1} parent=5 // pred_check_branch
      %126 = sbr.rel (%p123) target = $region12
    $region11: #{tpu_custom_call.1} parent=5 // pred_region
      %s127 = ssub.s32 %s9, 1
    $region12: #{tpu_custom_call.1} parent=5 // pred_fallthru
      _
    %p128 = scmp.lt.s32.totalorder %s9, 4
    // Predicated region
    $region13: #{tpu_custom_call.1} parent=5 // pred_check
      %p129 = pneg %p128
    $region14: #{tpu_custom_call.1} parent=5 // pred_check_branch
      %131 = sbr.rel (%p129) target = $region16
    $region15: #{tpu_custom_call.1} parent=5 // pred_region
      // Predicated region
      $region17: #{tpu_custom_call.1} parent=15 // pred_check
        %p132 = pneg %p29
      $region18: #{tpu_custom_call.1} parent=15 // pred_check_branch
        %134 = sbr.rel (%p132) target = $region20
      $region19: #{tpu_custom_call.1} parent=15 // pred_region
        %s135 = smul.u32 2, %s9
        %p136 = scmp.lt.s32.totalorder %s135, 7
        %s137 = scalar_select %p136, %s135, 7
        %s138 = smul.addr %s137, 8
        %s139 = scalar_lea.vmem %s0, %s138
        %s140 = smul.u32 2, %s9
      $region20: #{tpu_custom_call.1} parent=15 // pred_fallthru
        _
      // Predicated region
      $region21: #{tpu_custom_call.1} parent=15 // pred_check
        %p141 = pneg %p55
      $region22: #{tpu_custom_call.1} parent=15 // pred_check_branch
        %143 = sbr.rel (%p141) target = $region24
      $region23: #{tpu_custom_call.1} parent=15 // pred_region
        %s144 = smul.u32 2, %s9
        %p145 = scmp.lt.s32.totalorder %s144, 7
        %s146 = scalar_select %p145, %s144, 7
        %s147 = smul.addr %s146, 8
        %s148 = scalar_lea.vmem %s1, %s147
        %s149 = smul.u32 2, %s9
      $region24: #{tpu_custom_call.1} parent=15 // pred_fallthru
        _
      // Predicated region
      $region25: #{tpu_custom_call.1} parent=15 // pred_check
        %p150 = pneg %p81
      $region26: #{tpu_custom_call.1} parent=15 // pred_check_branch
        %152 = sbr.rel (%p150) target = $region28
      $region27: #{tpu_custom_call.1} parent=15 // pred_region
        %s153 = smul.u32 2, %s9
        %p154 = scmp.lt.s32.totalorder %s153, 7
        %s155 = scalar_select %p154, %s153, 7
        %s156 = smul.addr %s155, 8
        %s157 = scalar_lea.vmem %s2, %s156
        %s158 = smul.u32 2, %s9
      $region28: #{tpu_custom_call.1} parent=15 // pred_fallthru
        _
    $region16: #{tpu_custom_call.1} parent=5 // pred_fallthru
      _
    %p159 = scmp.le.s32.totalorder 1, %s9
    %p160 = scmp.lt.s32.totalorder %s9, 5
    %p161 = pnand %p159, %p160
    %p162 = pneg %p161
    // Predicated region
    $region29: #{tpu_custom_call.1} parent=5 // pred_check
      _
    $region30: #{tpu_custom_call.1} parent=5 // pred_check_branch
      %164 = sbr.rel (%p161) target = $region32
    $region31: #{tpu_custom_call.1} parent=5 // pred_region
      %s165 = ssub.s32 %s9, 1
      %s166 = smul.u32 2, %s14
      %p167 = scmp.lt.s32.totalorder %s166, 7
      %s168 = scalar_select %p167, %s166, 7
      %s169 = smul.addr %s168, 8
      %s170 = scalar_lea.vmem %s0, %s169
      %p171 = pneg %p35
      %p172 = pneg %p32
      %s173 = smul.u32 2, %s14
      %p174 = scmp.lt.s32.totalorder %s173, 7
      %s175 = scalar_select %p174, %s173, 7
      %s176 = smul.addr %s175, 8
      %s177 = scalar_lea.vmem %s1, %s176
      %p178 = pneg %p61
      %p179 = pneg %p58
      %s180 = smul.u32 2, %s14
      %p181 = scmp.lt.s32.totalorder %s180, 7
      %s182 = scalar_select %p181, %s180, 7
      %s183 = smul.addr %s182, 8
      %s184 = scalar_lea.vmem %s2, %s183
      %p185 = pneg %p87
      %p186 = pneg %p84
      %p187 = pneg %p113
      %p188 = pneg %p110
      %s189 = smul.u32 2, %s14
      %p190 = scmp.lt.s32.totalorder %s189, 7
      %s191 = scalar_select %p190, %s189, 7
      %s192 = smul.addr %s191, 8
      %s193 = scalar_lea.vmem %s3, %s192
      %s194 = smul.u32 2, %s14
      %p195 = scmp.lt.s32.totalorder %s194, 7
      %s196 = scalar_select %p195, %s194, 7
      %s197 = smul.addr %s196, 8
      %s198 = scalar_lea.vmem %s0, %s197
      %s199 = smul.u32 2, %s14
      %s200 = smul.u32 2, %s14
      %p201 = scmp.lt.s32.totalorder %s200, 7
      %s202 = scalar_select %p201, %s200, 7
      %s203 = smul.addr %s202, 8
      %s204 = scalar_lea.vmem %s1, %s203
      %s205 = smul.u32 2, %s14
      %s206 = smul.u32 2, %s14
      %p207 = scmp.lt.s32.totalorder %s206, 7
      %s208 = scalar_select %p207, %s206, 7
      %s209 = smul.addr %s208, 8
      %s210 = scalar_lea.vmem %s2, %s209
      %s211 = smul.u32 2, %s14
      %s212 = smul.u32 2, %s14
      %p213 = scmp.lt.s32.totalorder %s212, 7
      %s214 = scalar_select %p213, %s212, 7
      %s215 = smul.addr %s214, 8
      %s216 = scalar_lea.vmem %s3, %s215
      %s217 = smul.u32 2, %s14
      %v218 = vld [vmem:[%s198] sm:$0xff]
      %v219 = vld [vmem:[%s198 + $0x8] sm:$0xff]
      %v220 = vld [vmem:[%s204] sm:$0xff]
      %v221 = vld [vmem:[%s204 + $0x8] sm:$0xff]
      %v222 = vlaneseq
      %v223 = vand.u32 %v222, 127
      %224 = vset.pattern.permute.xlu0 0
      %225 = vperm.xlu0 %224, %v220
      %v226 = vpop.permute.xlu0 %225
      %227 = vset.pattern.permute.xlu0 0
      %228 = vperm.xlu0 %227, %v221
      %v229 = vpop.permute.xlu0 %228
      %vm230 = vcmp.eq.s32.totalorder %v223, %v226
      %vm231 = vcmp.eq.s32.totalorder %v223, %v229
      %vm232 = vcmask 130048
      %v233 = vsel %vm232, %v218, -inf
      %234 = vmax.xlane.f32.xlu0 %v233
      %v235 = vpop.xlane.xlu0 %234
      %v236 = vsel %vm232, %v219, -inf
      %237 = vmax.xlane.f32.xlu0 %v236
      %v238 = vpop.xlane.xlu0 %237
      %v239 = vsub.f32 %v218, %v235
      %v240 = vsub.f32 %v219, %v238
      %v241 = vmul.f32 %v239, 1.442695
      %v242 = vpow.pop %v241
      %v243 = vmul.f32 %v240, 1.442695
      %v244 = vpow.pop %v243
      %v245 = vsel %vm232, %v242, 0.0
      %246 = vadd.xlane.f32.xlu0 %v245
      %v247 = vpop.xlane.xlu0 %246
      %v248 = vsel %vm232, %v244, 0.0
      %249 = vadd.xlane.f32.xlu0 %v248
      %v250 = vpop.xlane.xlu0 %249
      %v251 = vlog2.pop %v247
      %v252 = vmul.f32 %v251, 0.6931472
      %v253 = vlog2.pop %v250
      %v254 = vmul.f32 %v253, 0.6931472
      %v255 = vadd.f32 %v235, %v252
      %v256 = vadd.f32 %v238, %v254
      %v257 = vsel %vm230, %v218, 0.0
      %v258 = vsel %vm231, %v219, 0.0
      %v259 = vsel %vm232, %v257, 0.0
      %260 = vadd.xlane.f32.xlu0 %v259
      %v261 = vpop.xlane.xlu0 %260
      %v262 = vsel %vm232, %v258, 0.0
      %263 = vadd.xlane.f32.xlu0 %v262
      %v264 = vpop.xlane.xlu0 %263
      %v265 = vsub.f32 %v255, %v261
      %v266 = vsub.f32 %v256, %v264
      %v267 = vld [vmem:[%s210] sm:$0xff]
      %v268 = vld [vmem:[%s210 + $0x8] sm:$0xff]
      %v269 = vmul.f32 %v265, %v267
      %v270 = vmul.f32 %v266, %v268
      %vm271 = vcmask 7168
      %272 = vst.msk [vmem:[%s216] sm:$0xff] %vm271, %v269
      %273 = vst.msk [vmem:[%s216 + $0x8] sm:$0xff] %vm271, %v270
      %s274 = smul.u32 2, %s14
      %p275 = scmp.lt.s32.totalorder %s274, 7
      %s276 = scalar_select %p275, %s274, 7
      %s277 = smul.addr %s276, 8
      %s278 = scalar_lea.vmem %s3, %s277
      // Predicated region
      $region33: #{tpu_custom_call.1} parent=31 // pred_check
        %p279 = pneg %p110
      $region34: #{tpu_custom_call.1} parent=31 // pred_check_branch
        %281 = sbr.rel (%p279) target = $region36
      $region35: #{tpu_custom_call.1} parent=31 // pred_region
        %s282 = smul.u32 2, %s14
      $region36: #{tpu_custom_call.1} parent=31 // pred_fallthru
        _
    $region32: #{tpu_custom_call.1} parent=5 // pred_fallthru
      _
    %p283 = scmp.le.s32.totalorder 2, %s9
    // Predicated region
    $region37: #{tpu_custom_call.1} parent=5 // pred_check
      %p284 = pneg %p283
    $region38: #{tpu_custom_call.1} parent=5 // pred_check_branch
      %286 = sbr.rel (%p284) target = $region40
    $region39: #{tpu_custom_call.1} parent=5 // pred_region
      %s287 = ssub.s32 %s9, 2
      // Predicated region
      $region41: #{tpu_custom_call.1} parent=39 // pred_check
        %p288 = pneg %p116
      $region42: #{tpu_custom_call.1} parent=39 // pred_check_branch
        %290 = sbr.rel (%p288) target = $region44
      $region43: #{tpu_custom_call.1} parent=39 // pred_region
        %s291 = smul.u32 2, %s15
        %p292 = scmp.lt.s32.totalorder %s291, 7
        %s293 = scalar_select %p292, %s291, 7
        %s294 = smul.addr %s293, 8
        %s295 = scalar_lea.vmem %s3, %s294
      $region44: #{tpu_custom_call.1} parent=39 // pred_fallthru
        _
    $region40: #{tpu_custom_call.1} parent=5 // pred_fallthru
      _
  $region6: #{tpu_custom_call.1} parent=0 // loop_footer
    %s13 = sadd.s32 1, %s9
  $region7: #{tpu_custom_call.1} parent=0 // loop_footer_branch
    %8 = sbr.rel target = $region3
  $region8: #{tpu_custom_call.1} parent=0 // loop_exit
    _

</llo_original>
